<compile_context>
chip_gen: v6e
topology: v6e:2x2x1
jax: 0.10.0
libtpu: 0.0.40
codegen_flags: <defaults>
</compile_context>

<pallas_src>
import math

import jax
import jax.numpy as jnp
from jax.experimental import pallas as pl
from jax.experimental.pallas import tpu as pltpu

EPS = 1e-12          # F.normalize default eps
EPS_SQ = EPS * EPS   # clamp on sum-of-squares so rsqrt == x / max(||x||, eps)


# ---------------------------------------------------------------------------
# Kernels
# ---------------------------------------------------------------------------

def _rnn_norm_kernel(x_ref, h_ref, wcat_ref, b_ref, o_ref):
    """h' = tanh([x, h] @ W_cat + b); then row L2-normalize.  One MXU matmul."""
    x = x_ref[...].astype(jnp.float32)
    h = h_ref[...].astype(jnp.float32)
    xh = jnp.concatenate([x, h], axis=-1)                       # (B, 2E)
    pre = jnp.dot(xh.astype(wcat_ref.dtype), wcat_ref[...],
                  preferred_element_type=jnp.float32) + b_ref[...].astype(jnp.float32)
    hn = jnp.tanh(pre)
    sumsq = jnp.sum(hn * hn, axis=-1, keepdims=True)
    inv = jax.lax.rsqrt(jnp.maximum(sumsq, EPS_SQ))             # == 1 / max(||hn||, eps)
    o_ref[...] = (hn * inv).astype(o_ref.dtype)


def _rnn_seq_kernel(x_ref, h0_ref, wcat_ref, b_ref, out_ref, h_sc):
    """T fused recurrent steps: weights resident, hidden state in VMEM scratch."""
    t = pl.program_id(0)

    @pl.when(t == 0)
    def _():
        h_sc[...] = h0_ref[...].astype(jnp.float32)

    x = x_ref[...].astype(jnp.float32)                          # (B, E) step input
    h = h_sc[...]                                               # (B, E) carried state
    xh = jnp.concatenate([x, h], axis=-1)                       # (B, 2E)
    pre = jnp.dot(xh.astype(wcat_ref.dtype), wcat_ref[...],
                  preferred_element_type=jnp.float32) + b_ref[...].astype(jnp.float32)
    hn = jnp.tanh(pre)
    sumsq = jnp.sum(hn * hn, axis=-1, keepdims=True)
    inv = jax.lax.rsqrt(jnp.maximum(sumsq, EPS_SQ))
    h_new = hn * inv
    h_sc[...] = h_new
    out_ref[...] = h_new.astype(out_ref.dtype)


def _add_norm_kernel(u_ref, i_ref, o_ref):
    """normalize(user_embd + item_embd) along the last dim."""
    s = u_ref[...].astype(jnp.float32) + i_ref[...].astype(jnp.float32)
    sumsq = jnp.sum(s * s, axis=-1, keepdims=True)
    inv = jax.lax.rsqrt(jnp.maximum(sumsq, EPS_SQ))
    o_ref[...] = (s * inv).astype(o_ref.dtype)


def _project_kernel(u_ref, td_ref, we_ref, ob_ref, o_ref):
    """user_embd * (1 + Linear(1, E)(timediffs)) with one_plus_b pre-folded."""
    u = u_ref[...].astype(jnp.float32)          # (B, E)
    td = td_ref[...].astype(jnp.float32)        # (B, 1)
    scale = td * we_ref[...] + ob_ref[...]      # (B,1)*(1,E) + (1,E) -> (B, E)
    o_ref[...] = (u * scale).astype(o_ref.dtype)


# ---------------------------------------------------------------------------
# Wrappers (jitted; full arrays resident in VMEM)
# ---------------------------------------------------------------------------

def _full_spec(shape):
    return pl.BlockSpec(shape, lambda: (0,) * len(shape))


@jax.jit
def rnn_cell_normalize(x, h, wcat, b):
    """x, h: (B, E); wcat: (2E, E) = [W_ih.T ; W_hh.T]; b: (1, E) = b_ih + b_hh."""
    B, E = x.shape
    return pl.pallas_call(
        _rnn_norm_kernel,
        out_shape=jax.ShapeDtypeStruct((B, E), x.dtype),
        in_specs=[_full_spec((B, E)), _full_spec((B, E)),
                  _full_spec((2 * E, E)), _full_spec((1, E))],
        out_specs=_full_spec((B, E)),
        input_output_aliases={1: 0},     # new state overwrites h in place
    )(x, h, wcat, b)


@jax.jit
def rnn_cell_normalize_sequence(x_seq, h0, wcat, b):
    """Fused T-step recurrence: h_t = normalize(tanh([x_t, h_{t-1}] @ W_cat + b)).

    x_seq: (T, B, E); h0: (B, E); returns all states (T, B, E).
    Weights/bias/h0 use constant index_maps -> DMA'd into VMEM once; the hidden
    state lives in a VMEM scratch across grid steps (no HBM round trips).
    """
    T, B, E = x_seq.shape
    return pl.pallas_call(
        _rnn_seq_kernel,
        out_shape=jax.ShapeDtypeStruct((T, B, E), h0.dtype),
        grid=(T,),
        in_specs=[pl.BlockSpec((None, B, E), lambda t: (t, 0, 0)),
                  pl.BlockSpec((B, E), lambda t: (0, 0)),
                  pl.BlockSpec((2 * E, E), lambda t: (0, 0)),
                  pl.BlockSpec((1, E), lambda t: (0, 0))],
        out_specs=pl.BlockSpec((None, B, E), lambda t: (t, 0, 0)),
        scratch_shapes=[pltpu.VMEM((B, E), jnp.float32)],
        compiler_params=pltpu.CompilerParams(
            dimension_semantics=("arbitrary",)),
    )(x_seq, h0, wcat, b)


@jax.jit
def add_normalize(u, i):
    B, E = u.shape
    return pl.pallas_call(
        _add_norm_kernel,
        out_shape=jax.ShapeDtypeStruct((B, E), u.dtype),
        in_specs=[_full_spec((B, E)), _full_spec((B, E))],
        out_specs=_full_spec((B, E)),
    )(u, i)


@jax.jit
def project(u, timediffs, we, one_plus_be):
    """u: (B, E); timediffs: (B, 1); we, one_plus_be: (1, E) pre-prepped params."""
    B, E = u.shape
    return pl.pallas_call(
        _project_kernel,
        out_shape=jax.ShapeDtypeStruct((B, E), u.dtype),
        in_specs=[_full_spec((B, E)), _full_spec((B, 1)),
                  _full_spec((1, E)), _full_spec((1, E))],
        out_specs=_full_spec((B, E)),
    )(u, timediffs, we, one_plus_be)


# ---------------------------------------------------------------------------
# DRIVER module (forward-pass only; deterministic synthetic parameters)
# ---------------------------------------------------------------------------

class DriverPallas:
    def __init__(self, num_users, num_items, embd_size, key, mxu_dtype=jnp.float32):
        # mxu_dtype=jnp.bfloat16 is recommended on v6e/v7x once E is scaled up;
        # default f32 keeps exact PyTorch semantics and suits v5e.
        self.embd_size = embd_size
        E = embd_size
        ks = jax.random.split(key, 10)
        stdv_rnn = 1.0 / math.sqrt(E)      # nn.RNNCell default: uniform(-stdv, stdv)
        stdv_lin = 1.0 / math.sqrt(1)      # NormalLinear(1, E): normal(0, 1/sqrt(in))
        u = lambda k, s: jax.random.uniform(k, s, jnp.float32, -stdv_rnn, stdv_rnn)

        # --- item_rnn: fused weight [W_ih.T ; W_hh.T] (2E, E), bias pre-summed ---
        item_w_ih = u(ks[0], (E, E))
        item_w_hh = u(ks[1], (E, E))
        item_b_ih = u(ks[2], (E,))
        item_b_hh = u(ks[3], (E,))
        self.item_wcat = jnp.concatenate([item_w_ih.T, item_w_hh.T], axis=0) \
            .astype(mxu_dtype)                                    # (2E, E)
        self.item_b = (item_b_ih + item_b_hh).reshape(1, E).astype(jnp.float32)

        # --- user_rnn ---
        user_w_ih = u(ks[4], (E, E))
        user_w_hh = u(ks[5], (E, E))
        user_b_ih = u(ks[6], (E,))
        user_b_hh = u(ks[7], (E,))
        self.user_wcat = jnp.concatenate([user_w_ih.T, user_w_hh.T], axis=0) \
            .astype(mxu_dtype)                                    # (2E, E)
        self.user_b = (user_b_ih + user_b_hh).reshape(1, E).astype(jnp.float32)

        # --- embd_layer = NormalLinear(1, E); weight (E,1) stored as (1,E) = W^T,
        #     bias pre-folded as 1 + b ---
        self.embd_we = (stdv_lin * jax.random.normal(ks[8], (E, 1), jnp.float32)) \
            .reshape(1, E).astype(jnp.float32)
        self.embd_one_plus_be = (1.0 + stdv_lin * jax.random.normal(ks[9], (E,), jnp.float32)) \
            .reshape(1, E).astype(jnp.float32)

        # TODO(synk): prediction_layer / user_att / room_att params are unused in
        # forward(); aggregate_function / predict_item_embd left untranslated.

    def forward(self, user_embd, item_embd, timediffs, select=None):
        if select == 'item_update':
            return rnn_cell_normalize(user_embd, item_embd, self.item_wcat, self.item_b)
        elif select == 'user_update':
            return rnn_cell_normalize(item_embd, user_embd, self.user_wcat, self.user_b)
        elif select == 'item_next_update':
            return add_normalize(user_embd, item_embd)
        elif select == 'project':
            return project(user_embd, timediffs, self.embd_we, self.embd_one_plus_be)
        else:
            raise ValueError(f"unknown select: {select}")

    def forward_sequence(self, x_seq, h0, select='item_update'):
        """Fused equivalent of T repeated forward(select=...) recurrent steps.

        x_seq: (T, B, E) per-step inputs (the `user_embd` argument for
        'item_update', the `item_embd` argument for 'user_update');
        h0: (B, E) initial recurrent state.  Returns all T states (T, B, E).
        """
        if select == 'item_update':
            return rnn_cell_normalize_sequence(x_seq, h0, self.item_wcat, self.item_b)
        elif select == 'user_update':
            return rnn_cell_normalize_sequence(x_seq, h0, self.user_wcat, self.user_b)
        else:
            raise ValueError(f"unknown select for sequence: {select}")


# ---------------------------------------------------------------------------
# Main
# ---------------------------------------------------------------------------

if __name__ == "__main__":
    num_users, num_items, embd_size = 16, 16, 32
    batch = 8
    seq_len = 6

    key = jax.random.PRNGKey(0)
    k_model, k_u, k_i, k_t, k_seq = jax.random.split(key, 5)

    model = DriverPallas(num_users, num_items, embd_size, k_model)

    user_embd = jax.random.normal(k_u, (batch, embd_size), jnp.float32)
    item_embd = jax.random.normal(k_i, (batch, embd_size), jnp.float32)
    timediffs = jax.random.uniform(k_t, (batch, 1), jnp.float32)

    # Per-call path: all four select branches.
    outs = []
    for sel in ('item_update', 'user_update', 'item_next_update', 'project'):
        outs.append(model.forward(user_embd, item_embd, timediffs, select=sel))
    for o in outs:
        jax.block_until_ready(o)
        assert o.shape == (batch, embd_size)
        assert bool(jnp.all(jnp.isfinite(o)))

    # Fused multi-step recurrence == T repeated per-step forward calls.
    x_seq = jax.random.normal(k_seq, (seq_len, batch, embd_size), jnp.float32)
    fused = model.forward_sequence(x_seq, item_embd, select='item_update')
    jax.block_until_ready(fused)
    assert fused.shape == (seq_len, batch, embd_size)
    assert bool(jnp.all(jnp.isfinite(fused)))

    h = item_embd
    for t in range(seq_len):
        h = model.forward(x_seq[t], h, None, select='item_update')
    jax.block_until_ready(h)
    assert bool(jnp.allclose(fused[-1], h, rtol=1e-4, atol=1e-5))

    print("KERNEL_OK")
</pallas_src>

<mosaic_0001>
module attributes {stable_mosaic.version = 11 : i64} {
  func.func @_rnn_norm_kernel(%arg0: memref<8x32xf32, #tpu.memory_space<vmem>>, %arg1: memref<8x32xf32, #tpu.memory_space<vmem>>, %arg2: memref<64x32xf32, #tpu.memory_space<vmem>>, %arg3: memref<1x32xf32, #tpu.memory_space<vmem>>, %arg4: memref<8x32xf32, #tpu.memory_space<vmem>>) attributes {dimension_semantics = [], scalar_prefetch = 0 : i64, scratch_operands = 0 : i64, tpu.core_type = #tpu.core_type<tc>} {
    %c0 = arith.constant 0 : index
    %c0_0 = arith.constant 0 : index
    %0 = vector.load %arg0[%c0, %c0_0] : memref<8x32xf32, #tpu.memory_space<vmem>>, vector<8x32xf32>
    %c0_1 = arith.constant 0 : index
    %c0_2 = arith.constant 0 : index
    %1 = vector.load %arg1[%c0_1, %c0_2] : memref<8x32xf32, #tpu.memory_space<vmem>>, vector<8x32xf32>
    %2 = tpu.concatenate %0, %1 in 1 : vector<8x32xf32>, vector<8x32xf32> -> vector<8x64xf32>
    %c0_3 = arith.constant 0 : index
    %c0_4 = arith.constant 0 : index
    %3 = vector.load %arg2[%c0_3, %c0_4] : memref<64x32xf32, #tpu.memory_space<vmem>>, vector<64x32xf32>
    %cst = arith.constant dense<0.000000e+00> : vector<8x32xf32>
    %4 = tpu.matmul %2, %3, %cst {dimension_numbers = #tpu.dot_dimension_numbers<[1], [0], [0], [1], [0, 0, 1, 1], [], []>} : vector<8x64xf32>, vector<64x32xf32>, vector<8x32xf32> -> vector<8x32xf32>
    %c0_5 = arith.constant 0 : index
    %c0_6 = arith.constant 0 : index
    %5 = vector.load %arg3[%c0_5, %c0_6] : memref<1x32xf32, #tpu.memory_space<vmem>>, vector<1x32xf32>
    %6 = vector.broadcast %5 : vector<1x32xf32> to vector<8x32xf32>
    %7 = arith.addf %4, %6 : vector<8x32xf32>
    %8 = math.tanh %7 : vector<8x32xf32>
    %9 = arith.mulf %8, %8 : vector<8x32xf32>
    %cst_7 = arith.constant dense<0.000000e+00> : vector<8xf32>
    %10 = vector.multi_reduction <add>, %9, %cst_7 [1] : vector<8x32xf32> to vector<8xf32>
    %11 = vector.shape_cast %10 : vector<8xf32> to vector<8x1xf32>
    %cst_8 = arith.constant 1.000000e-24 : f32
    %12 = vector.broadcast %cst_8 : f32 to vector<8x1xf32>
    %13 = arith.maximumf %11, %12 : vector<8x1xf32>
    %14 = math.rsqrt %13 : vector<8x1xf32>
    %15 = vector.broadcast %14 : vector<8x1xf32> to vector<8x32xf32>
    %16 = arith.mulf %8, %15 : vector<8x32xf32>
    %c0_9 = arith.constant 0 : index
    %c0_10 = arith.constant 0 : index
    %17 = vector.load %arg4[%c0_9, %c0_10] : memref<8x32xf32, #tpu.memory_space<vmem>>, vector<8x32xf32>
    tpu.vector_store %arg4[%c0_9, %c0_10], %16 {strides = array<i32>} : memref<8x32xf32, #tpu.memory_space<vmem>>, vector<8x32xf32>,
    return
  }
}

</mosaic_0001>

<llo_original>
// kernel: rnn_cell_normalize.1
$region0: #{rnn_cell_normalize.1}
  #allocation0 [shape = 'u32[]', space=smem, size = 0x4, offset = 0x4, fixed_abs, tag = 'smem constant byte address 0x4 - core index']
  #allocation1 [shape = 'u32[144,128]{1,0:T(1,128)}', space=vmem, size = 0x12000, scoped, tag = 'internal scratch']
  %s0 = inlined_call_operand.vmem [shape: f32[8,32], index: 0, kind: input, shape index: {}]
  %s1 = inlined_call_operand.hbm [shape: f32[8,32], index: 1, kind: input, shape index: {}, may-alias: {1,4}]
  %s2 = inlined_call_operand.vmem [shape: f32[64,32], index: 2, kind: input, shape index: {}]
  %s3 = inlined_call_operand.vmem [shape: f32[1,32], index: 3, kind: input, shape index: {}]
  %s4 = inlined_call_operand.hbm [shape: f32[8,32], index: 4, kind: output, shape index: {}, may-alias: {1,4}]
  %s5 = sld [smem:[#allocation0]]
  $region30: #{rnn_cell_normalize.1} parent=0
    _
  %s7 = ssub.s32 1, %s5
  %s8 = scalar_select 0, %s7, %s5
  $region1: #{rnn_cell_normalize.1} parent=0
    #allocation2 [shape = 'u8[4096]{0}', space=vmem, size = 0x1000, scoped, tag = 'input window, operand 1, single buffered']
    #allocation3 [shape = 's32[1]{0}', space=sflag, size = 0x4, scoped, tag = 'scoped memory for rnn_cell_normalize.1']
    #allocation4 [shape = 's32[1]{0}', space=sflag, size = 0x4, scoped, tag = 'scoped memory for rnn_cell_normalize.1']
    #allocation5 [shape = 'u8[4096]{0}', space=vmem, size = 0x1000, scoped, tag = 'output window, operand 0, single buffered']
    %9 = vsyncpa [#allocation3], 0
    %10 = vsyncpa [#allocation4], 0
    // Predicated region
    $region2: #{rnn_cell_normalize.1} parent=1 // pred_check
      _
    $region3: #{rnn_cell_normalize.1} parent=1 // pred_check_branch
      %12 = sbr.rel (0) target = $region5
    $region4: #{rnn_cell_normalize.1} parent=1 // pred_region
      _
    $region5: #{rnn_cell_normalize.1} parent=1 // pred_fallthru
      _
    // Predicated region
    $region6: #{rnn_cell_normalize.1} parent=1 // pred_check
      _
    $region7: #{rnn_cell_normalize.1} parent=1 // pred_check_branch
      %14 = sbr.rel (0) target = $region9
    $region8: #{rnn_cell_normalize.1} parent=1 // pred_region
      %s16 = ssub.s32 128, 128
      %17 = vsyncadd [#allocation3], %s16
      %s19 = sshll.u32 [#allocation2], 4
      %s20 = int_to_ptr.vmem [resolvable:$true] %s19
      %22 = dma.hbm_to_vmem [thread:$0]  %s1, 128, %s20, [#allocation3]
    $region9: #{rnn_cell_normalize.1} parent=1 // pred_fallthru
      _
    // Predicated region
    $region10: #{rnn_cell_normalize.1} parent=1 // pred_check
      _
    $region11: #{rnn_cell_normalize.1} parent=1 // pred_check_branch
      %24 = sbr.rel (0) target = $region13
    $region12: #{rnn_cell_normalize.1} parent=1 // pred_region
      _
    $region13: #{rnn_cell_normalize.1} parent=1 // pred_fallthru
      _
    // Predicated region
    $region14: #{rnn_cell_normalize.1} parent=1 // pred_check
      _
    $region15: #{rnn_cell_normalize.1} parent=1 // pred_check_branch
      %26 = sbr.rel (0) target = $region17
    $region16: #{rnn_cell_normalize.1} parent=1 // pred_region
      _
    $region17: #{rnn_cell_normalize.1} parent=1 // pred_fallthru
      _
    // Predicated region
    $region18: #{rnn_cell_normalize.1} parent=1 // pred_check
      _
    $region19: #{rnn_cell_normalize.1} parent=1 // pred_check_branch
      %28 = sbr.rel (0) target = $region21
    $region20: #{rnn_cell_normalize.1} parent=1 // pred_region
      %29 = dma.done [#allocation3], 128
    $region21: #{rnn_cell_normalize.1} parent=1 // pred_fallthru
      _
    %v30 = vld [vmem:[%s0] sm:$0xff]
    %v31 = vld [vmem:[#allocation2] sm:$0xff]
    %33 = vrot.lane.b32.xlu0 %v31, 32
    %v34 = vpop.permute.xlu0 %33
    %vm36 = vcmask 261120
    %v37 = vsel %vm36, %v30, %v34
    %v38 = vld [vmem:[%s2] sm:$0xff]
    %v39 = vld [vmem:[%s2 + $0x8] sm:$0xff]
    %v40 = vld [vmem:[%s2 + $0x10] sm:$0xff]
    %v41 = vld [vmem:[%s2 + $0x18] sm:$0xff]
    %v42 = vld [vmem:[%s2 + $0x20] sm:$0xff]
    %v43 = vld [vmem:[%s2 + $0x28] sm:$0xff]
    %v44 = vld [vmem:[%s2 + $0x30] sm:$0xff]
    %v45 = vld [vmem:[%s2 + $0x38] sm:$0xff]
    %v46 = vld [vmem:[%s3] sm:$0x1]
    %v48 = vlaneseq
    %v49 = vshrl.u32 %v48, 7
    %v50 = vsub.s32 0, %v49
    %v51 = vrot.slane %v46, %v50
    %vm53 = vcmask 523264
    %v55 = vsel %vm53, %v37, 0
    %57 = vmatprep.subr.mxu0 0.0
    %58 = vmatpush1.msra.mxu0 0.0
    %59 = vmatprep.subr.mxu0 0.0
    %60 = vmatpush1.msra.mxu0 0.0
    %61 = vmatprep.subr.mxu0 0.0
    %62 = vmatpush1.msra.mxu0 0.0
    %63 = vmatprep.subr.mxu0 0.0
    %64 = vmatpush1.msra.mxu0 0.0
    %65 = vmatprep.subr.mxu0 0.0
    %66 = vmatpush1.msra.mxu0 0.0
    %67 = vmatprep.subr.mxu0 0.0
    %68 = vmatpush1.msra.mxu0 0.0
    %69 = vmatprep.subr.mxu0 0.0
    %70 = vmatpush1.msra.mxu0 0.0
    %71 = vmatprep.subr.mxu0 0.0
    %72 = vmatpush1.msra.mxu0 0.0
    %73 = vmatprep.subr.mxu0 0.0
    %74 = vmatpush1.msra.mxu0 %v45
    %75 = vmatprep.subr.mxu0 0.0
    %76 = vmatpush1.msra.mxu0 %v44
    %77 = vmatprep.subr.mxu0 0.0
    %78 = vmatpush1.msra.mxu0 %v43
    %79 = vmatprep.subr.mxu0 0.0
    %80 = vmatpush1.msra.mxu0 %v42
    %81 = vmatprep.subr.mxu0 0.0
    %82 = vmatpush1.msra.mxu0 %v41
    %83 = vmatprep.subr.mxu0 0.0
    %84 = vmatpush1.msra.mxu0 %v40
    %85 = vmatprep.subr.mxu0 0.0
    %86 = vmatpush1.msra.mxu0 %v39
    %87 = vmatprep.subr.mxu0 0.0
    %88 = vmatpush1.msra.mxu0 %v38
    %89 = vmatprep.subr.mxu0 0.0
    %90 = vmatpush2.msra.mxu0 0.0
    %91 = vmatprep.subr.mxu0 0.0
    %92 = vmatpush2.msra.mxu0 0.0
    %93 = vmatprep.subr.mxu0 0.0
    %94 = vmatpush2.msra.mxu0 0.0
    %95 = vmatprep.subr.mxu0 0.0
    %96 = vmatpush2.msra.mxu0 0.0
    %97 = vmatprep.subr.mxu0 0.0
    %98 = vmatpush2.msra.mxu0 0.0
    %99 = vmatprep.subr.mxu0 0.0
    %100 = vmatpush2.msra.mxu0 0.0
    %101 = vmatprep.subr.mxu0 0.0
    %102 = vmatpush2.msra.mxu0 0.0
    %103 = vmatprep.subr.mxu0 0.0
    %104 = vmatpush2.msra.mxu0 0.0
    %105 = vmatprep.subr.mxu0 0.0
    %106 = vmatpush2.msra.mxu0 0.0
    %107 = vmatprep.subr.mxu0 0.0
    %108 = vmatpush2.msra.mxu0 0.0
    %109 = vmatprep.subr.mxu0 0.0
    %110 = vmatpush2.msra.mxu0 0.0
    %111 = vmatprep.subr.mxu0 0.0
    %112 = vmatpush2.msra.mxu0 0.0
    %113 = vmatprep.subr.mxu0 0.0
    %114 = vmatpush2.msra.mxu0 0.0
    %115 = vmatprep.subr.mxu0 0.0
    %116 = vmatpush2.msra.mxu0 0.0
    %117 = vmatprep.subr.mxu0 0.0
    %118 = vmatpush2.msra.mxu0 0.0
    %119 = vmatprep.subr.mxu0 0.0
    %120 = vmatpush2.msra.mxu0 0.0
    %121 = vmatprep.mubr.f32.mxu0 0.0
    %122 = vmatmul.mubr.f32.gmra.mxu0 %v55
    %v123 = vpop.f32.mrf.mxu0
    %v124 = vadd.f32 %v51, %v123
    %v125 = vpop.f32.mrf.mxu0
    %126 = vdwg.mxu0
    %v127 = vtanh.pop %v124
    %v128 = vmul.f32 %v127, %v127
    %v129 = vsel %vm36, %v128, 0.0
    %130 = vadd.xlane.f32.xlu0 %v129
    %v131 = vpop.xlane.xlu0 %130
    %v132 = vmax.f32 %v131, 1e-24
    %v133 = vrsqrt.pop %v132
    %v134 = vmul.f32 %v127, %v133
    %135 = vst.msk [vmem:[#allocation5] sm:$0xff] %vm36, %v134
    // Predicated region
    $region22: #{rnn_cell_normalize.1} parent=1 // pred_check
      _
    $region23: #{rnn_cell_normalize.1} parent=1 // pred_check_branch
      %137 = sbr.rel (0) target = $region25
    $region24: #{rnn_cell_normalize.1} parent=1 // pred_region
      %s139 = ssub.s32 128, 128
      %140 = vsyncadd [#allocation4], %s139
      %s142 = sshll.u32 [#allocation5], 4
      %s143 = int_to_ptr.vmem [resolvable:$true] %s142
      %145 = dma.vmem_to_hbm [thread:$0]  %s143, 128, %s4, [#allocation4]
    $region25: #{rnn_cell_normalize.1} parent=1 // pred_fallthru
      _
    // Predicated region
    $region26: #{rnn_cell_normalize.1} parent=1 // pred_check
      _
    $region27: #{rnn_cell_normalize.1} parent=1 // pred_check_branch
      %147 = sbr.rel (0) target = $region29
    $region28: #{rnn_cell_normalize.1} parent=1 // pred_region
      %148 = dma.done [#allocation4], 128
    $region29: #{rnn_cell_normalize.1} parent=1 // pred_fallthru
      _
    %149 = vsyncpa [#allocation3], 1
    %150 = vsyncpa [#allocation4], 1

</llo_original>
